<compile_context>
chip_gen: v7x
topology: tpu7x:2x2x1
jax: 0.10.0
libtpu: 0.0.40
codegen_flags: <defaults>
</compile_context>

<pallas_src>
import functools

import jax
import jax.numpy as jnp
from jax import lax
from jax.experimental import pallas as pl
from jax.experimental.pallas import tpu as pltpu


def _softmax_rows(x, inv_tau):
    """Row-wise softmax of (x * inv_tau) in f32 (matches F.softmax(x / tau, dim=1))."""
    z = x.astype(jnp.float32) * inv_tau
    z = z - jnp.max(z, axis=1, keepdims=True)
    e = jnp.exp(z)
    return e * pl.reciprocal(jnp.sum(e, axis=1, keepdims=True), approx=False)


def _neg_dist_kernel(a_ref, b_ref, out_ref, acc_ref, *rest, inv_tau, dist, scale):
    i = pl.program_id(0)          # row block of a
    j = pl.program_id(1)          # column block (rows of b), reduction axis

    @pl.when(jnp.logical_and(i == 0, j == 0))
    def _():
        out_ref[0, 0] = jnp.float32(0.0)

    @pl.when(j == 0)
    def _():
        acc_ref[...] = jnp.zeros_like(acc_ref)

    a = _softmax_rows(a_ref[...], inv_tau)    # [tm, D] f32
    b = _softmax_rows(b_ref[...], inv_tau)    # [tn, D] f32
    tm, d = a.shape
    tn = b.shape[0]

    if dist == "l2_square":
        # sum_j ||a_i - b_j||^2 = tn*||a_i||^2 + sum_j ||b_j||^2 - 2 a_i . (sum_j b_j)
        a_sq = jnp.sum(a * a, axis=1, keepdims=True)                 # [tm, 1]
        b_colsum = jnp.sum(b, axis=0, keepdims=True)                 # [1, D]
        b_sqsum = jnp.sum(b * b)                                     # scalar
        tile_rowsum = (tn * a_sq + b_sqsum
                       - 2.0 * jnp.sum(a * b_colsum, axis=1, keepdims=True))
    elif dist == "l2":
        # a . b^T via dot_general (transpose folded into the matmul, no b.T copy).
        ab = lax.dot_general(a, b, (((1,), (1,)), ((), ())),
                             preferred_element_type=jnp.float32)     # [tm, tn]
        a_sq = jnp.sum(a * a, axis=1, keepdims=True)                 # [tm, 1]
        # ||b_j||^2 produced directly in row (lane) layout via a tiny ones-matvec.
        b_sq_row = lax.dot_general(jnp.ones((1, d), jnp.float32), b * b,
                                   (((1,), (1,)), ((), ())),
                                   preferred_element_type=jnp.float32)   # [1, tn]
        d2 = jnp.maximum(a_sq + b_sq_row - 2.0 * ab, 0.0)
        tile_rowsum = jnp.sum(jnp.sqrt(d2), axis=1, keepdims=True)   # [tm, 1]
    elif dist == "l1":
        # Stream rows of the softmaxed b tile; never materialize [tm, tn, D].
        b_sm_ref = rest[0]
        b_sm_ref[...] = b

        def body(jj, carry):
            brow = b_sm_ref[pl.ds(jj, 1), :]                         # [1, D]
            return carry + jnp.sum(jnp.abs(a - brow), axis=1, keepdims=True)

        tile_rowsum = lax.fori_loop(0, tn, body, jnp.zeros((tm, 1), jnp.float32))
    else:
        raise ValueError(f"Invalid dist: {dist}")

    acc_ref[...] += tile_rowsum

    @pl.when(j == pl.num_programs(1) - 1)
    def _():
        # -mean_j dist = -(1/M)*rowsum ; 'mean' reduction folds an extra 1/N into `scale`.
        out_ref[0, 0] += -scale * jnp.sum(acc_ref[...])


def _pick_block(n, cap=256):
    """Full extent if small, else the largest multiple-of-8 divisor of n that is <= cap."""
    if n <= cap:
        return n
    t = (cap // 8) * 8
    while t >= 8:
        if n % t == 0:
            return t
        t -= 8
    return n   # fallback: single (large) block


def neg_dist_loss_v2(logit_original, logit_negaug, *,
                     temperature=1.0, dist="l2", reduction="mean",
                     row_block=None, col_block=None):
    """JAX/Pallas equivalent of NegDistLossv2.forward. Returns a scalar (f32)."""
    assert dist in ("l2", "l2_square", "l1"), f"Invalid dist: {dist}"
    assert reduction in ("mean", "sum"), f"Invalid reduction: {reduction}"
    n, d = logit_original.shape
    m, d_b = logit_negaug.shape
    assert d == d_b

    tm = _pick_block(n) if row_block is None else int(row_block)
    tn = _pick_block(m) if col_block is None else int(col_block)
    assert n % tm == 0 and (tm == n or tm % 8 == 0), (n, tm)
    assert m % tn == 0 and (tn == m or tn % 8 == 0), (m, tn)

    scale = 1.0 / m if reduction == "sum" else 1.0 / (n * m)

    kernel = functools.partial(
        _neg_dist_kernel,
        inv_tau=1.0 / float(temperature),
        dist=dist,
        scale=float(scale),
    )

    scratch = [pltpu.VMEM((tm, 1), jnp.float32)]           # running per-row distance sum
    if dist == "l1":
        scratch.append(pltpu.VMEM((tn, d), jnp.float32))   # softmaxed b tile for row streaming

    grid_spec = pltpu.PrefetchScalarGridSpec(
        num_scalar_prefetch=0,
        grid=(n // tm, m // tn),
        in_specs=[
            pl.BlockSpec((tm, d), lambda i, j: (i, 0)),
            pl.BlockSpec((tn, d), lambda i, j: (j, 0)),
        ],
        # Scalar loss accumulated in SMEM (avoids a lane-sparse (1,1) VMEM store).
        out_specs=pl.BlockSpec(memory_space=pltpu.MemorySpace.SMEM),
        scratch_shapes=tuple(scratch),
    )

    out = pl.pallas_call(
        kernel,
        out_shape=jax.ShapeDtypeStruct((1, 1), jnp.float32),
        grid_spec=grid_spec,
        compiler_params=pltpu.CompilerParams(
            # Both axes revisit the same scalar/accumulator -> keep them sequential.
            dimension_semantics=("arbitrary", "arbitrary")),
    )(logit_original, logit_negaug)
    return out[0, 0]


def _reference(logit_original, logit_negaug, *, tau=1.0, dist="l2", reduction="mean"):
    """Pure-JAX reference (softmax -> cdist -> -mean(dim=1) -> reduce)."""
    a = jax.nn.softmax(logit_original.astype(jnp.float32) / tau, axis=1)
    b = jax.nn.softmax(logit_negaug.astype(jnp.float32) / tau, axis=1)
    if dist == "l1":
        pd = jnp.sum(jnp.abs(a[:, None, :] - b[None, :, :]), axis=-1)
    else:
        a_sq = jnp.sum(a * a, axis=1, keepdims=True)
        b_sq = jnp.sum(b * b, axis=1)[None, :]
        d2 = a_sq + b_sq - 2.0 * (a @ b.T)
        pd = jnp.sqrt(jnp.maximum(d2, 0.0)) if dist == "l2" else d2
    rows = -jnp.mean(pd, axis=1)
    return jnp.mean(rows) if reduction == "mean" else jnp.sum(rows)


if __name__ == "__main__":
    key = jax.random.PRNGKey(0)
    k1, k2 = jax.random.split(key)
    N, D = 16, 32                      # batch of 16 samples, 32-way logits
    logit_original = jax.random.normal(k1, (N, D), dtype=jnp.float32)
    logit_negaug = jax.random.normal(k2, (N, D), dtype=jnp.float32)

    configs = [
        # (dist, reduction, tau, row_block, col_block)
        ("l2",        "mean", 1.0, None, None),   # single-block path
        ("l2",        "sum",  0.7, 8,    8),      # 2x2 grid, online accumulation
        ("l2_square", "mean", 1.0, 8,    8),      # algebraic path, no N x M matrix
        ("l1",        "mean", 1.0, 8,    8),      # streamed row loop
    ]
    for dist, reduction, tau, rb, cb in configs:
        loss = neg_dist_loss_v2(logit_original, logit_negaug,
                                temperature=tau, dist=dist, reduction=reduction,
                                row_block=rb, col_block=cb)
        loss = jax.block_until_ready(loss)
        ref = _reference(logit_original, logit_negaug,
                         tau=tau, dist=dist, reduction=reduction)
        assert jnp.allclose(loss, ref, atol=1e-5, rtol=1e-5), (
            dist, reduction, tau, float(loss), float(ref))
    print("KERNEL_OK")
</pallas_src>

<mosaic_0001>
module attributes {stable_mosaic.version = 11 : i64} {
  func.func @_neg_dist_kernel(%arg0: i32, %arg1: i32, %arg2: memref<16x32xf32, #tpu.memory_space<vmem>>, %arg3: memref<16x32xf32, #tpu.memory_space<vmem>>, %arg4: memref<1x1xf32, #tpu.memory_space<smem>>, %arg5: memref<16x1xf32, #tpu.memory_space<vmem>>) attributes {dimension_semantics = [#tpu.dimension_semantics<arbitrary>, #tpu.dimension_semantics<arbitrary>], iteration_bounds = array<i64: 1, 1>, scalar_prefetch = 0 : i64, scratch_operands = 1 : i64, tpu.core_type = #tpu.core_type<tc>, window_params = [{transform_indices = @transform_0, window_bounds = array<i64: 16, 32>}, {transform_indices = @transform_1, window_bounds = array<i64: 16, 32>}, {transform_indices = @transform_2, window_bounds = array<i64: 1, 1>}]} {
    %c0_i32 = arith.constant 0 : i32
    %0 = arith.cmpi eq, %arg0, %c0_i32 : i32
    %c0_i32_0 = arith.constant 0 : i32
    %1 = arith.cmpi eq, %arg1, %c0_i32_0 : i32
    %2 = arith.andi %0, %1 : i1
    %3 = arith.extui %2 : i1 to i32
    %c0_i32_1 = arith.constant 0 : i32
    %4 = arith.cmpi ne, %3, %c0_i32_1 : i32
    scf.if %4 {
      %cst_25 = arith.constant 0.000000e+00 : f32
      %c0_26 = arith.constant 0 : index
      %c0_27 = arith.constant 0 : index
      %58 = memref.load %arg4[%c0_26, %c0_27] : memref<1x1xf32, #tpu.memory_space<smem>>
      memref.store %cst_25, %arg4[%c0_26, %c0_27] : memref<1x1xf32, #tpu.memory_space<smem>>
    } else {
    }
    %c0_i32_2 = arith.constant 0 : i32
    %5 = arith.cmpi eq, %arg1, %c0_i32_2 : i32
    %6 = arith.extui %5 : i1 to i32
    %c0_i32_3 = arith.constant 0 : i32
    %7 = arith.cmpi ne, %6, %c0_i32_3 : i32
    scf.if %7 {
      %cst_25 = arith.constant 0.000000e+00 : f32
      %58 = vector.broadcast %cst_25 : f32 to vector<16x1xf32>
      %c0_26 = arith.constant 0 : index
      %c0_27 = arith.constant 0 : index
      %59 = vector.load %arg5[%c0_26, %c0_27] : memref<16x1xf32, #tpu.memory_space<vmem>>, vector<16x1xf32>
      tpu.vector_store %arg5[%c0_26, %c0_27], %58 {strides = array<i32>} : memref<16x1xf32, #tpu.memory_space<vmem>>, vector<16x1xf32>,
    } else {
    }
    %c0 = arith.constant 0 : index
    %c0_4 = arith.constant 0 : index
    %8 = vector.load %arg2[%c0, %c0_4] : memref<16x32xf32, #tpu.memory_space<vmem>>, vector<16x32xf32>
    %cst = arith.constant 1.000000e+00 : f32
    %9 = vector.broadcast %cst : f32 to vector<16x32xf32>
    %10 = arith.mulf %8, %9 : vector<16x32xf32>
    %cst_5 = arith.constant dense<0xFF800000> : vector<16xf32>
    %11 = vector.multi_reduction <maximumf>, %10, %cst_5 [1] : vector<16x32xf32> to vector<16xf32>
    %12 = vector.shape_cast %11 : vector<16xf32> to vector<16x1xf32>
    %13 = vector.broadcast %12 : vector<16x1xf32> to vector<16x32xf32>
    %14 = arith.subf %10, %13 : vector<16x32xf32>
    %15 = math.exp %14 : vector<16x32xf32>
    %cst_6 = arith.constant dense<0.000000e+00> : vector<16xf32>
    %16 = vector.multi_reduction <add>, %15, %cst_6 [1] : vector<16x32xf32> to vector<16xf32>
    %17 = vector.shape_cast %16 : vector<16xf32> to vector<16x1xf32>
    %18 = tpu.reciprocal %17 : vector<16x1xf32> -> vector<16x1xf32>
    %19 = vector.broadcast %18 : vector<16x1xf32> to vector<16x32xf32>
    %20 = arith.mulf %15, %19 : vector<16x32xf32>
    %c0_7 = arith.constant 0 : index
    %c0_8 = arith.constant 0 : index
    %21 = vector.load %arg3[%c0_7, %c0_8] : memref<16x32xf32, #tpu.memory_space<vmem>>, vector<16x32xf32>
    %cst_9 = arith.constant 1.000000e+00 : f32
    %22 = vector.broadcast %cst_9 : f32 to vector<16x32xf32>
    %23 = arith.mulf %21, %22 : vector<16x32xf32>
    %cst_10 = arith.constant dense<0xFF800000> : vector<16xf32>
    %24 = vector.multi_reduction <maximumf>, %23, %cst_10 [1] : vector<16x32xf32> to vector<16xf32>
    %25 = vector.shape_cast %24 : vector<16xf32> to vector<16x1xf32>
    %26 = vector.broadcast %25 : vector<16x1xf32> to vector<16x32xf32>
    %27 = arith.subf %23, %26 : vector<16x32xf32>
    %28 = math.exp %27 : vector<16x32xf32>
    %cst_11 = arith.constant dense<0.000000e+00> : vector<16xf32>
    %29 = vector.multi_reduction <add>, %28, %cst_11 [1] : vector<16x32xf32> to vector<16xf32>
    %30 = vector.shape_cast %29 : vector<16xf32> to vector<16x1xf32>
    %31 = tpu.reciprocal %30 : vector<16x1xf32> -> vector<16x1xf32>
    %32 = vector.broadcast %31 : vector<16x1xf32> to vector<16x32xf32>
    %33 = arith.mulf %28, %32 : vector<16x32xf32>
    %cst_12 = arith.constant dense<0.000000e+00> : vector<16x16xf32>
    %34 = tpu.matmul %20, %33, %cst_12 {dimension_numbers = #tpu.dot_dimension_numbers<[1], [1], [0], [0], [0, 0, 1, 0], [], []>} : vector<16x32xf32>, vector<16x32xf32>, vector<16x16xf32> -> vector<16x16xf32>
    %35 = arith.mulf %20, %20 : vector<16x32xf32>
    %cst_13 = arith.constant dense<0.000000e+00> : vector<16xf32>
    %36 = vector.multi_reduction <add>, %35, %cst_13 [1] : vector<16x32xf32> to vector<16xf32>
    %37 = vector.shape_cast %36 : vector<16xf32> to vector<16x1xf32>
    %cst_14 = arith.constant 1.000000e+00 : f32
    %38 = vector.broadcast %cst_14 : f32 to vector<1x32xf32>
    %39 = arith.mulf %33, %33 : vector<16x32xf32>
    %cst_15 = arith.constant dense<0.000000e+00> : vector<1x16xf32>
    %40 = tpu.matmul %38, %39, %cst_15 {dimension_numbers = #tpu.dot_dimension_numbers<[1], [1], [0], [0], [0, 0, 1, 0], [], []>} : vector<1x32xf32>, vector<16x32xf32>, vector<1x16xf32> -> vector<1x16xf32>
    %41 = vector.broadcast %37 : vector<16x1xf32> to vector<16x16xf32>
    %42 = vector.broadcast %40 : vector<1x16xf32> to vector<16x16xf32>
    %43 = arith.addf %41, %42 : vector<16x16xf32>
    %cst_16 = arith.constant 2.000000e+00 : f32
    %44 = vector.broadcast %cst_16 : f32 to vector<16x16xf32>
    %45 = arith.mulf %44, %34 : vector<16x16xf32>
    %46 = arith.subf %43, %45 : vector<16x16xf32>
    %cst_17 = arith.constant 0.000000e+00 : f32
    %47 = vector.broadcast %cst_17 : f32 to vector<16x16xf32>
    %48 = arith.maximumf %46, %47 : vector<16x16xf32>
    %49 = math.sqrt %48 : vector<16x16xf32>
    %cst_18 = arith.constant dense<0.000000e+00> : vector<16xf32>
    %50 = vector.multi_reduction <add>, %49, %cst_18 [1] : vector<16x16xf32> to vector<16xf32>
    %51 = vector.shape_cast %50 : vector<16xf32> to vector<16x1xf32>
    %c0_19 = arith.constant 0 : index
    %c0_20 = arith.constant 0 : index
    %52 = vector.load %arg5[%c0_19, %c0_20] : memref<16x1xf32, #tpu.memory_space<vmem>>, vector<16x1xf32>
    %53 = arith.addf %52, %51 : vector<16x1xf32>
    %c0_21 = arith.constant 0 : index
    %c0_22 = arith.constant 0 : index
    %54 = vector.load %arg5[%c0_21, %c0_22] : memref<16x1xf32, #tpu.memory_space<vmem>>, vector<16x1xf32>
    tpu.vector_store %arg5[%c0_21, %c0_22], %53 {strides = array<i32>} : memref<16x1xf32, #tpu.memory_space<vmem>>, vector<16x1xf32>,
    %c0_i32_23 = arith.constant 0 : i32
    %55 = arith.cmpi eq, %arg1, %c0_i32_23 : i32
    %56 = arith.extui %55 : i1 to i32
    %c0_i32_24 = arith.constant 0 : i32
    %57 = arith.cmpi ne, %56, %c0_i32_24 : i32
    scf.if %57 {
      %c0_25 = arith.constant 0 : index
      %c0_26 = arith.constant 0 : index
      %58 = memref.load %arg4[%c0_25, %c0_26] : memref<1x1xf32, #tpu.memory_space<smem>>
      %c0_27 = arith.constant 0 : index
      %c0_28 = arith.constant 0 : index
      %59 = vector.load %arg5[%c0_27, %c0_28] : memref<16x1xf32, #tpu.memory_space<vmem>>, vector<16x1xf32>
      %60 = vector.shape_cast %59 : vector<16x1xf32> to vector<1x16x1xf32>
      %cst_29 = arith.constant dense<0.000000e+00> : vector<1xf32>
      %61 = vector.multi_reduction <add>, %60, %cst_29 [1, 2] : vector<1x16x1xf32> to vector<1xf32>
      %62 = vector.shape_cast %61 : vector<1xf32> to vector<1x1x1xf32>
      %63 = vector.extract %62[0, 0, 0] : f32 from vector<1x1x1xf32>
      %cst_30 = arith.constant -3.906250e-03 : f32
      %64 = arith.mulf %cst_30, %63 : f32
      %65 = arith.addf %58, %64 : f32
      %c0_31 = arith.constant 0 : index
      %c0_32 = arith.constant 0 : index
      %66 = memref.load %arg4[%c0_31, %c0_32] : memref<1x1xf32, #tpu.memory_space<smem>>
      memref.store %65, %arg4[%c0_31, %c0_32] : memref<1x1xf32, #tpu.memory_space<smem>>
    } else {
    }
    return
  }
  func.func @transform_0(%arg0: i32, %arg1: i32) -> (i32, i32) {
    %c0_i32 = arith.constant 0 : i32
    %c0_i32_0 = arith.constant 0 : i32
    return %arg0, %c0_i32 : i32, i32
  }
  func.func @transform_1(%arg0: i32, %arg1: i32) -> (i32, i32) {
    %c0_i32 = arith.constant 0 : i32
    %c0_i32_0 = arith.constant 0 : i32
    return %arg1, %c0_i32 : i32, i32
  }
  func.func @transform_2(%arg0: i32, %arg1: i32) -> (i32, i32) {
    %c0_i32 = arith.constant 0 : i32
    %c0_i32_0 = arith.constant 0 : i32
    %c0_i32_1 = arith.constant 0 : i32
    return %c0_i32, %c0_i32_0 : i32, i32
  }
}

</mosaic_0001>

<llo_original>
// kernel: tpu_custom_call.1
$region0: #{tpu_custom_call.1}
  #allocation0 [shape = 'u32[]', space=smem, size = 0x4, offset = 0x4, fixed_abs, tag = 'smem constant byte address 0x4 - core index']
  #allocation1 [shape = 'u32[144,128]{1,0:T(1,128)}', space=vmem, size = 0x12000, scoped, tag = 'internal scratch']
  #allocation2 [shape = 'f32[16,1]{1,0:T(8,128)}', space=vmem, size = 0x2000, scoped, tag = 'scratch operand']
  %s0 = inlined_call_operand.hbm [shape: f32[16,32], index: 0, kind: input, shape index: {}]
  %s1 = inlined_call_operand.hbm [shape: f32[16,32], index: 1, kind: input, shape index: {}]
  %s2 = inlined_call_operand.hbm [shape: f32[1,1], index: 2, kind: output, shape index: {}]
  %s3 = sld [smem:[#allocation0]]
  $region38: #{tpu_custom_call.1} parent=0
    _
  %s5 = ssub.s32 1, %s3
  %s6 = scalar_select 0, %s5, %s3
  $region1: #{tpu_custom_call.1} parent=0
    #allocation3 [shape = 'u8[8192]{0}', space=vmem, size = 0x2000, scoped, tag = 'input window, operand 0, single buffered']
    #allocation4 [shape = 's32[1]{0}', space=sflag, size = 0x4, scoped, tag = 'scoped memory for tpu_custom_call.1']
    #allocation5 [shape = 's32[1]{0}', space=sflag, size = 0x4, scoped, tag = 'scoped memory for tpu_custom_call.1']
    #allocation6 [shape = 'u8[8192]{0}', space=vmem, size = 0x2000, scoped, tag = 'input window, operand 1, single buffered']
    #allocation7 [shape = 's32[1]{0}', space=sflag, size = 0x4, scoped, tag = 'scoped memory for tpu_custom_call.1']
    #allocation8 [shape = 'u8[512]{0}', space=smem, size = 0x200, scoped, tag = 'output window, operand 0, single buffered']
    %7 = vsyncpa [#allocation4], 0
    %8 = vsyncpa [#allocation7], 0
    %9 = vsyncpa [#allocation5], 0
    // Predicated region
    $region2: #{tpu_custom_call.1} parent=1 // pred_check
      _
    $region3: #{tpu_custom_call.1} parent=1 // pred_check_branch
      %11 = sbr.rel (0) target = $region5
    $region4: #{tpu_custom_call.1} parent=1 // pred_region
      %s13 = ssub.s32 256, 256
      %14 = vsyncadd [#allocation4], %s13
      %s15 = sshll.u32 [#allocation3], 4
      %s16 = int_to_ptr.vmem [resolvable:$true] %s15
      %21 = dma.hbm_to_vmem [thread:$0]  %s0, 256, %s16, [#allocation4], 128, 128, 8
    $region5: #{tpu_custom_call.1} parent=1 // pred_fallthru
      _
    // Predicated region
    $region6: #{tpu_custom_call.1} parent=1 // pred_check
      _
    $region7: #{tpu_custom_call.1} parent=1 // pred_check_branch
      %23 = sbr.rel (0) target = $region9
    $region8: #{tpu_custom_call.1} parent=1 // pred_region
      %s25 = ssub.s32 256, 256
      %26 = vsyncadd [#allocation7], %s25
      %s27 = sshll.u32 [#allocation6], 4
      %s28 = int_to_ptr.vmem [resolvable:$true] %s27
      %33 = dma.hbm_to_vmem [thread:$0]  %s1, 256, %s28, [#allocation7], 128, 128, 8
    $region9: #{tpu_custom_call.1} parent=1 // pred_fallthru
      _
    // Predicated region
    $region10: #{tpu_custom_call.1} parent=1 // pred_check
      _
    $region11: #{tpu_custom_call.1} parent=1 // pred_check_branch
      %35 = sbr.rel (0) target = $region13
    $region12: #{tpu_custom_call.1} parent=1 // pred_region
      %36 = dma.done [#allocation4], 256
    $region13: #{tpu_custom_call.1} parent=1 // pred_fallthru
      _
    // Predicated region
    $region14: #{tpu_custom_call.1} parent=1 // pred_check
      _
    $region15: #{tpu_custom_call.1} parent=1 // pred_check_branch
      %38 = sbr.rel (0) target = $region17
    $region16: #{tpu_custom_call.1} parent=1 // pred_region
      %39 = dma.done [#allocation7], 256
    $region17: #{tpu_custom_call.1} parent=1 // pred_fallthru
      _
    %p40 = scmp.eq.s32.totalorder 0, 0
    %p41 = scmp.eq.s32.totalorder 0, 0
    %p42 = pnand %p40, %p41
    %p43 = pneg %p42
    // Predicated region
    $region18: #{tpu_custom_call.1} parent=1 // pred_check
      _
    $region19: #{tpu_custom_call.1} parent=1 // pred_check_branch
      %45 = sbr.rel (%p42) target = $region21
    $region20: #{tpu_custom_call.1} parent=1 // pred_region
      %s46 = scalar_lea.smem [#allocation8], 0
      %47 = sst [smem:[%s46]] 0.0
    $region21: #{tpu_custom_call.1} parent=1 // pred_fallthru
      _
    // Predicated region
    $region22: #{tpu_custom_call.1} parent=1 // pred_check
      %p48 = pneg %p41
    $region23: #{tpu_custom_call.1} parent=1 // pred_check_branch
      %50 = sbr.rel (%p48) target = $region25
    $region24: #{tpu_custom_call.1} parent=1 // pred_region
      %vm51 = vcmask 7168
      %52 = vst.msk [vmem:[#allocation2] sm:$0xff] %vm51, 0.0
      %53 = vst.msk [vmem:[#allocation2 + $0x8] sm:$0xff] %vm51, 0.0
    $region25: #{tpu_custom_call.1} parent=1 // pred_fallthru
      _
    %v54 = vld [vmem:[#allocation3] sm:$0xff]
    %v55 = vld [vmem:[#allocation3 + $0x8] sm:$0xff]
    %vm56 = vcmask 261120
    %v57 = vsel %vm56, %v54, -inf
    %58 = vmax.xlane.f32.xlu0 %v57
    %v59 = vpop.xlane.xlu0 %58
    %v60 = vsel %vm56, %v55, -inf
    %61 = vmax.xlane.f32.xlu0 %v60
    %v62 = vpop.xlane.xlu0 %61
    %v63 = vsub.f32 %v54, %v59
    %v64 = vsub.f32 %v55, %v62
    %v65 = vmul.f32 %v63, 1.442695
    %v66 = vpow.pop %v65
    %v67 = vmul.f32 %v64, 1.442695
    %v68 = vpow.pop %v67
    %v69 = vsel %vm56, %v66, 0.0
    %70 = vadd.xlane.f32.xlu0 %v69
    %v71 = vpop.xlane.xlu0 %70
    %v72 = vsel %vm56, %v68, 0.0
    %73 = vadd.xlane.f32.xlu0 %v72
    %v74 = vpop.xlane.xlu0 %73
    %v75 = vrcp.pop %v71
    %v76 = vrcp.pop %v74
    %v77 = vmul.f32 %v66, %v75
    %v78 = vmul.f32 %v68, %v76
    %v79 = vld [vmem:[#allocation6] sm:$0xff]
    %v80 = vld [vmem:[#allocation6 + $0x8] sm:$0xff]
    %v81 = vsel %vm56, %v79, -inf
    %82 = vmax.xlane.f32.xlu0 %v81
    %v83 = vpop.xlane.xlu0 %82
    %v84 = vsel %vm56, %v80, -inf
    %85 = vmax.xlane.f32.xlu0 %v84
    %v86 = vpop.xlane.xlu0 %85
    %v87 = vsub.f32 %v79, %v83
    %v88 = vsub.f32 %v80, %v86
    %v89 = vmul.f32 %v87, 1.442695
    %v90 = vpow.pop %v89
    %v91 = vmul.f32 %v88, 1.442695
    %v92 = vpow.pop %v91
    %v93 = vsel %vm56, %v90, 0.0
    %94 = vadd.xlane.f32.xlu0 %v93
    %v95 = vpop.xlane.xlu0 %94
    %v96 = vsel %vm56, %v92, 0.0
    %97 = vadd.xlane.f32.xlu0 %v96
    %v98 = vpop.xlane.xlu0 %97
    %v99 = vrcp.pop %v95
    %v100 = vrcp.pop %v98
    %v101 = vmul.f32 %v90, %v99
    %v102 = vmul.f32 %v92, %v100
    %v104 = vsel %vm56, %v77, 0
    %v107 = vsel %vm56, %v78, 0
    %v110 = vsel %vm56, %v101, 0
    %v113 = vsel %vm56, %v102, 0
    %115 = vmatprep.subr.mxu0 0.0
    %116 = vmatpush1.xpose.msra.mxu0 %v110
    %117 = vmatprep.subr.mxu0 0.0
    %118 = vmatpush1.xpose.msra.mxu0 %v113
    %119 = vmatprep.subr.mxu0 0.0
    %120 = vmatpush1.xpose.msra.mxu0 0.0
    %121 = vmatprep.subr.mxu0 0.0
    %122 = vmatpush1.xpose.msra.mxu0 0.0
    %123 = vmatprep.subr.mxu0 0.0
    %124 = vmatpush1.xpose.msra.mxu0 0.0
    %125 = vmatprep.subr.mxu0 0.0
    %126 = vmatpush1.xpose.msra.mxu0 0.0
    %127 = vmatprep.subr.mxu0 0.0
    %128 = vmatpush1.xpose.msra.mxu0 0.0
    %129 = vmatprep.subr.mxu0 0.0
    %130 = vmatpush1.xpose.msra.mxu0 0.0
    %131 = vmatprep.subr.mxu0 0.0
    %132 = vmatpush1.xpose.msra.mxu0 0.0
    %133 = vmatprep.subr.mxu0 0.0
    %134 = vmatpush1.xpose.msra.mxu0 0.0
    %135 = vmatprep.subr.mxu0 0.0
    %136 = vmatpush1.xpose.msra.mxu0 0.0
    %137 = vmatprep.subr.mxu0 0.0
    %138 = vmatpush1.xpose.msra.mxu0 0.0
    %139 = vmatprep.subr.mxu0 0.0
    %140 = vmatpush1.xpose.msra.mxu0 0.0
    %141 = vmatprep.subr.mxu0 0.0
    %142 = vmatpush1.xpose.msra.mxu0 0.0
    %143 = vmatprep.subr.mxu0 0.0
    %144 = vmatpush1.xpose.msra.mxu0 0.0
    %145 = vmatprep.subr.mxu0 0.0
    %146 = vmatpush1.xpose.msra.mxu0 0.0
    %147 = vmatprep.subr.mxu0 0.0
    %148 = vmatpush1.xpose.msra.mxu0 0.0
    %149 = vmatprep.subr.mxu0 0.0
    %150 = vmatpush1.xpose.msra.mxu0 0.0
    %151 = vmatprep.subr.mxu0 0.0
    %152 = vmatpush1.xpose.msra.mxu0 0.0
    %153 = vmatprep.subr.mxu0 0.0
    %154 = vmatpush1.xpose.msra.mxu0 0.0
    %155 = vmatprep.subr.mxu0 0.0
    %156 = vmatpush1.xpose.msra.mxu0 0.0
    %157 = vmatprep.subr.mxu0 0.0
    %158 = vmatpush1.xpose.msra.mxu0 0.0
    %159 = vmatprep.subr.mxu0 0.0
    %160 = vmatpush1.xpose.msra.mxu0 0.0
    %161 = vmatprep.subr.mxu0 0.0
    %162 = vmatpush1.xpose.msra.mxu0 0.0
    %163 = vmatprep.subr.mxu0 0.0
    %164 = vmatpush1.xpose.msra.mxu0 0.0
    %165 = vmatprep.subr.mxu0 0.0
    %166 = vmatpush1.xpose.msra.mxu0 0.0
    %167 = vmatprep.subr.mxu0 0.0
    %168 = vmatpush1.xpose.msra.mxu0 0.0
    %169 = vmatprep.subr.mxu0 0.0
    %170 = vmatpush1.xpose.msra.mxu0 0.0
    %171 = vmatprep.subr.mxu0 0.0
    %172 = vmatpush1.xpose.msra.mxu0 0.0
    %173 = vmatprep.subr.mxu0 0.0
    %174 = vmatpush1.xpose.msra.mxu0 0.0
    %175 = vmatprep.subr.mxu0 0.0
    %176 = vmatpush1.xpose.msra.mxu0 0.0
    %177 = vmatprep.subr.mxu0 0.0
    %178 = vmatpush1.xpose.msra.mxu0 0.0
    %179 = vmatprep.mubr.f32.mxu0 0.0
    %180 = vmatmul.mubr.f32.gmra.mrb[0].mxu0 %v104
    %v181 = vpop.f32.mrb[0].mxu0
    %v182 = vadd.f32 0.0, %v181
    %v183 = vpop.f32.mrb[0].mxu0
    %184 = vmatprep.mubr.f32.mxu0 0.0
    %185 = vmatmul.mubr.f32.gmra.mrb[0].mxu0 %v107
    %v186 = vpop.f32.mrb[0].mxu0
    %v187 = vadd.f32 0.0, %v186
    %v188 = vpop.f32.mrb[0].mxu0
    %189 = vdwg.mxu0
    %v190 = vmul.f32 %v77, %v77
    %v191 = vmul.f32 %v78, %v78
    %v192 = vsel %vm56, %v190, 0.0
    %193 = vadd.xlane.f32.xlu0 %v192
    %v194 = vpop.xlane.xlu0 %193
    %v195 = vsel %vm56, %v191, 0.0
    %196 = vadd.xlane.f32.xlu0 %v195
    %v197 = vpop.xlane.xlu0 %196
    %v198 = vmul.f32 %v101, %v101
    %v199 = vmul.f32 %v102, %v102
    %v201 = vsel %vm56, 1.0, 0
    %v204 = vsel %vm56, %v198, 0
    %v207 = vsel %vm56, %v199, 0
    %209 = vmatprep.subr.mxu0 0.0
    %210 = vmatpush1.xpose.msra.mxu0 %v204
    %211 = vmatprep.subr.mxu0 0.0
    %212 = vmatpush1.xpose.msra.mxu0 %v207
    %213 = vmatprep.subr.mxu0 0.0
    %214 = vmatpush1.xpose.msra.mxu0 0.0
    %215 = vmatprep.subr.mxu0 0.0
    %216 = vmatpush1.xpose.msra.mxu0 0.0
    %217 = vmatprep.subr.mxu0 0.0
    %218 = vmatpush1.xpose.msra.mxu0 0.0
    %219 = vmatprep.subr.mxu0 0.0
    %220 = vmatpush1.xpose.msra.mxu0 0.0
    %221 = vmatprep.subr.mxu0 0.0
    %222 = vmatpush1.xpose.msra.mxu0 0.0
    %223 = vmatprep.subr.mxu0 0.0
    %224 = vmatpush1.xpose.msra.mxu0 0.0
    %225 = vmatprep.subr.mxu0 0.0
    %226 = vmatpush1.xpose.msra.mxu0 0.0
    %227 = vmatprep.subr.mxu0 0.0
    %228 = vmatpush1.xpose.msra.mxu0 0.0
    %229 = vmatprep.subr.mxu0 0.0
    %230 = vmatpush1.xpose.msra.mxu0 0.0
    %231 = vmatprep.subr.mxu0 0.0
    %232 = vmatpush1.xpose.msra.mxu0 0.0
    %233 = vmatprep.subr.mxu0 0.0
    %234 = vmatpush1.xpose.msra.mxu0 0.0
    %235 = vmatprep.subr.mxu0 0.0
    %236 = vmatpush1.xpose.msra.mxu0 0.0
    %237 = vmatprep.subr.mxu0 0.0
    %238 = vmatpush1.xpose.msra.mxu0 0.0
    %239 = vmatprep.subr.mxu0 0.0
    %240 = vmatpush1.xpose.msra.mxu0 0.0
    %241 = vmatprep.subr.mxu0 0.0
    %242 = vmatpush1.xpose.msra.mxu0 0.0
    %243 = vmatprep.subr.mxu0 0.0
    %244 = vmatpush1.xpose.msra.mxu0 0.0
    %245 = vmatprep.subr.mxu0 0.0
    %246 = vmatpush1.xpose.msra.mxu0 0.0
    %247 = vmatprep.subr.mxu0 0.0
    %248 = vmatpush1.xpose.msra.mxu0 0.0
    %249 = vmatprep.subr.mxu0 0.0
    %250 = vmatpush1.xpose.msra.mxu0 0.0
    %251 = vmatprep.subr.mxu0 0.0
    %252 = vmatpush1.xpose.msra.mxu0 0.0
    %253 = vmatprep.subr.mxu0 0.0
    %254 = vmatpush1.xpose.msra.mxu0 0.0
    %255 = vmatprep.subr.mxu0 0.0
    %256 = vmatpush1.xpose.msra.mxu0 0.0
    %257 = vmatprep.subr.mxu0 0.0
    %258 = vmatpush1.xpose.msra.mxu0 0.0
    %259 = vmatprep.subr.mxu0 0.0
    %260 = vmatpush1.xpose.msra.mxu0 0.0
    %261 = vmatprep.subr.mxu0 0.0
    %262 = vmatpush1.xpose.msra.mxu0 0.0
    %263 = vmatprep.subr.mxu0 0.0
    %264 = vmatpush1.xpose.msra.mxu0 0.0
    %265 = vmatprep.subr.mxu0 0.0
    %266 = vmatpush1.xpose.msra.mxu0 0.0
    %267 = vmatprep.subr.mxu0 0.0
    %268 = vmatpush1.xpose.msra.mxu0 0.0
    %269 = vmatprep.subr.mxu0 0.0
    %270 = vmatpush1.xpose.msra.mxu0 0.0
    %271 = vmatprep.subr.mxu0 0.0
    %272 = vmatpush1.xpose.msra.mxu0 0.0
    %273 = vmatprep.mubr.f32.mxu0 0.0
    %274 = vmatmul.mubr.f32.gmra.mrb[0].mxu0 %v201
    %v275 = vpop.f32.mrb[0].mxu0
    %v276 = vadd.f32 0.0, %v275
    %v277 = vpop.f32.mrb[0].mxu0
    %278 = vdwg.mxu0
    %v279 = vlaneseq
    %v280 = vshrl.u32 %v279, 7
    %v281 = vsub.s32 0, %v280
    %v282 = vrot.slane %v276, %v281
    %v283 = vadd.f32 %v194, %v282
    %v284 = vadd.f32 %v197, %v282
    %v285 = vmul.f32 %v182, 2.0
    %v286 = vmul.f32 %v187, 2.0
    %v287 = vsub.f32 %v283, %v285
    %v288 = vsub.f32 %v284, %v286
    %v289 = vmax.f32 %v287, 0.0
    %v290 = vmax.f32 %v288, 0.0
    %v291 = vrsqrt.pop %v289
    %v292 = vmul.f32 %v289, %v291
    %vm293 = vcmp.eq.f32.partialorder %v289, inf
    %v294 = vsel %vm293, %v289, %v292
    %vm295 = vcmp.eq.f32.partialorder %v289, 0.0
    %v296 = vand.u32 %v289, 2147483648
    %v297 = vsel %vm295, %v296, %v294
    %v298 = vrsqrt.pop %v290
    %v299 = vmul.f32 %v290, %v298
    %vm300 = vcmp.eq.f32.partialorder %v290, inf
    %v301 = vsel %vm300, %v290, %v299
    %vm302 = vcmp.eq.f32.partialorder %v290, 0.0
    %v303 = vand.u32 %v290, 2147483648
    %v304 = vsel %vm302, %v303, %v301
    %vm305 = vcmask 130048
    %v306 = vsel %vm305, %v297, 0.0
    %307 = vadd.xlane.f32.xlu0 %v306
    %v308 = vpop.xlane.xlu0 %307
    %v309 = vsel %vm305, %v304, 0.0
    %310 = vadd.xlane.f32.xlu0 %v309
    %v311 = vpop.xlane.xlu0 %310
    %v312 = vld [vmem:[#allocation2] sm:$0xff]
    %v313 = vld [vmem:[#allocation2 + $0x8] sm:$0xff]
    %v314 = vadd.f32 %v312, %v308
    %v315 = vadd.f32 %v313, %v311
    %vm316 = vcmask 7168
    %317 = vst.msk [vmem:[#allocation2] sm:$0xff] %vm316, %v314
    %318 = vst.msk [vmem:[#allocation2 + $0x8] sm:$0xff] %vm316, %v315
    // Predicated region
    $region26: #{tpu_custom_call.1} parent=1 // pred_check
      %p319 = pneg %p41
    $region27: #{tpu_custom_call.1} parent=1 // pred_check_branch
      %321 = sbr.rel (%p319) target = $region29
    $region28: #{tpu_custom_call.1} parent=1 // pred_region
      %s322 = sld [smem:[#allocation8]]
      %v323 = vld [vmem:[#allocation2] sm:$0xff]
      %v324 = vld [vmem:[#allocation2 + $0x8] sm:$0xff]
      %v325 = vsel %vm316, %v323, 0.0
      %v326 = vsel %vm316, %v324, 0.0
      %v327 = vadd.f32 %v325, %v326
      %328 = vadd.xlane.f32.xlu0 %v327
      %v329 = vpop.xlane.xlu0 %328
      %v330 = vrot.slane %v329, 4
      %v331 = vadd.f32 %v329, %v330
      %v332 = vrot.slane %v331, 2
      %v333 = vadd.f32 %v331, %v332
      %v334 = vrot.slane %v333, 1
      %v335 = vadd.f32 %v333, %v334
      %s336 = vtos %v335
      %s337 = smul.f32 %s336, -0.00390625
      %s338 = sadd.f32 %s322, %s337
      %s339 = scalar_lea.smem [#allocation8], 0
      %340 = sst [smem:[%s339]] %s338
    $region29: #{tpu_custom_call.1} parent=1 // pred_fallthru
      _
    // Predicated region
    $region30: #{tpu_custom_call.1} parent=1 // pred_check
      _
    $region31: #{tpu_custom_call.1} parent=1 // pred_check_branch
      %342 = sbr.rel (0) target = $region33
    $region32: #{tpu_custom_call.1} parent=1 // pred_region
      %s344 = ssub.s32 16, 16
      %345 = vsyncadd [#allocation5], %s344
      %348 = dma.smem_to_hbm [#allocation8], 16, %s2, [#allocation5]
    $region33: #{tpu_custom_call.1} parent=1 // pred_fallthru
      _
    // Predicated region
    $region34: #{tpu_custom_call.1} parent=1 // pred_check
      _
    $region35: #{tpu_custom_call.1} parent=1 // pred_check_branch
      %350 = sbr.rel (0) target = $region37
    $region36: #{tpu_custom_call.1} parent=1 // pred_region
      %351 = dma.done [#allocation5], 16
    $region37: #{tpu_custom_call.1} parent=1 // pred_fallthru
      _
    %352 = sfence
    %353 = vsyncpa [#allocation4], 1
    %354 = vsyncpa [#allocation7], 1
    %355 = vsyncpa [#allocation5], 1

</llo_original>
